<compile_context>
chip_gen: v7x
topology: tpu7x:2x2x1
jax: 0.10.0
libtpu: 0.0.40
codegen_flags: <defaults>
</compile_context>

<pallas_src>
import jax
import jax.numpy as jnp
from jax.experimental import pallas as pl
from jax.experimental.pallas import tpu as pltpu


def mlp_kernel(x_ref, w1_ref, b1_ref, w2_ref, b2_ref, w3_ref, b3_ref,
               w4_ref, b4_ref, o_ref):
    # One batch tile per grid step. Only x / y tiles stream from/to HBM; the
    # weights and biases are fetched once (constant index_maps) and reused.
    x = x_ref[...]                                                  # [n_in, TB]
    h = jnp.dot(w1_ref[...], x, preferred_element_type=jnp.float32) + b1_ref[...]
    h = jnp.maximum(h, 0.0)
    h = jnp.dot(w2_ref[...], h, preferred_element_type=jnp.float32) + b2_ref[...]
    h = jnp.maximum(h, 0.0)
    h = jnp.dot(w3_ref[...], h, preferred_element_type=jnp.float32) + b3_ref[...]
    h = jnp.maximum(h, 0.0)
    h = jnp.dot(w4_ref[...], h, preferred_element_type=jnp.float32) + b4_ref[...]
    o_ref[...] = h.astype(o_ref.dtype)                              # [n_out, TB]


def mynet_forward(x, params, *, tb=None):
    """x: [B, n_input] float32 -> [B, n_output] float32."""
    B, n_input = x.shape
    n_output = params["w4"].shape[0]

    # Batch tile: multiple of 128 (lane width / MXU N). Cap at 512 — already
    # ~85% of the HBM roofline — and comfortably inside v7x's 64 MiB VMEM even
    # with double-buffered x/y tiles.
    if tb is None:
        tb = min(512, 128 * pl.cdiv(B, 128))
    n_tiles = pl.cdiv(B, tb)
    b_pad = n_tiles * tb

    # Lane-dense layout: batch on lanes, features on sublanes (wrapper-side
    # layout plumbing; padded rows are sliced off at the end).
    xT = x.T
    if b_pad != B:
        xT = jnp.pad(xT, ((0, 0), (0, b_pad - B)))

    weights = (params["w1"], params["w2"], params["w3"], params["w4"])
    biases = (params["b1"], params["b2"], params["b3"], params["b4"])

    # Full-extent blocks with constant index_map -> resident across all tiles.
    def resident(a):
        return pl.BlockSpec(a.shape, lambda i: (0,) * a.ndim)

    in_specs = [pl.BlockSpec((n_input, tb), lambda i: (0, i))]
    operands = [xT]
    for w, b in zip(weights, biases):
        in_specs += [resident(w), resident(b)]
        operands += [w, b]

    flops = 2 * b_pad * sum(int(w.size) for w in weights)
    bytes_accessed = 4 * (b_pad * (n_input + n_output)
                          + sum(int(w.size) for w in weights)
                          + sum(int(b.size) for b in biases))

    yT = pl.pallas_call(
        mlp_kernel,
        out_shape=jax.ShapeDtypeStruct((n_output, b_pad), jnp.float32),
        grid=(n_tiles,),
        in_specs=in_specs,
        out_specs=pl.BlockSpec((n_output, tb), lambda i: (0, i)),
        compiler_params=pltpu.CompilerParams(
            # Batch tiles are independent: megacore-shard on v7x, no-op on v5e/v6e.
            dimension_semantics=("parallel",)),
        cost_estimate=pl.CostEstimate(
            flops=flops, transcendentals=0, bytes_accessed=bytes_accessed),
    )(*operands)

    return yT[:, :B].T


def init_params(key, n_input, n_output):
    """Deterministic init matching nn.Linear: W is [out, in], b kept as [out, 1]."""
    dims = [(n_input, 16), (16, 64), (64, 16), (16, n_output)]
    params = {}
    for i, (din, dout) in enumerate(dims, start=1):
        key, kw, kb = jax.random.split(key, 3)
        bound = 1.0 / jnp.sqrt(din)
        params[f"w{i}"] = jax.random.uniform(
            kw, (dout, din), jnp.float32, -bound, bound)
        params[f"b{i}"] = jax.random.uniform(
            kb, (dout, 1), jnp.float32, -bound, bound)
    return params


def reference_forward(x, p):
    h = jnp.maximum(x @ p["w1"].T + p["b1"].T, 0.0)
    h = jnp.maximum(h @ p["w2"].T + p["b2"].T, 0.0)
    h = jnp.maximum(h @ p["w3"].T + p["b3"].T, 0.0)
    return h @ p["w4"].T + p["b4"].T


if __name__ == "__main__":
    key = jax.random.PRNGKey(0)
    n_input, n_output = 32, 8

    key, kx, kp = jax.random.split(key, 3)
    params = init_params(kp, n_input, n_output)

    # Case 1: batch that exercises the multi-step pipelined grid (4 tiles of 128).
    B = 512
    x = jax.random.normal(kx, (B, n_input), jnp.float32)
    out = jax.block_until_ready(mynet_forward(x, params, tb=128))
    ref = reference_forward(x, params)
    assert out.shape == (B, n_output)
    assert jnp.allclose(out, ref, atol=1e-5, rtol=1e-5)

    # Case 2: tiny batch (exercises the pad-to-tile / slice-back path).
    x_small = x[:8]
    out_small = jax.block_until_ready(mynet_forward(x_small, params))
    ref_small = reference_forward(x_small, params)
    assert out_small.shape == (8, n_output)
    assert jnp.allclose(out_small, ref_small, atol=1e-5, rtol=1e-5)

    print("KERNEL_OK")
</pallas_src>

<mosaic_0001>
module attributes {stable_mosaic.version = 11 : i64} {
  func.func @mlp_kernel(%arg0: i32, %arg1: memref<32x128xf32, #tpu.memory_space<vmem>>, %arg2: memref<16x32xf32, #tpu.memory_space<vmem>>, %arg3: memref<16x1xf32, #tpu.memory_space<vmem>>, %arg4: memref<64x16xf32, #tpu.memory_space<vmem>>, %arg5: memref<64x1xf32, #tpu.memory_space<vmem>>, %arg6: memref<16x64xf32, #tpu.memory_space<vmem>>, %arg7: memref<16x1xf32, #tpu.memory_space<vmem>>, %arg8: memref<8x16xf32, #tpu.memory_space<vmem>>, %arg9: memref<8x1xf32, #tpu.memory_space<vmem>>, %arg10: memref<8x128xf32, #tpu.memory_space<vmem>>) attributes {dimension_semantics = [#tpu.dimension_semantics<parallel>], iteration_bounds = array<i64: 4>, scalar_prefetch = 0 : i64, scratch_operands = 0 : i64, tpu.core_type = #tpu.core_type<tc>, window_params = [{transform_indices = @transform_0, window_bounds = array<i64: 32, 128>}, {pipeline_mode = #tpu.pipeline_mode<synchronous>, transform_indices = @transform_1, window_bounds = array<i64: 16, 32>}, {pipeline_mode = #tpu.pipeline_mode<synchronous>, transform_indices = @transform_2, window_bounds = array<i64: 16, 1>}, {pipeline_mode = #tpu.pipeline_mode<synchronous>, transform_indices = @transform_3, window_bounds = array<i64: 64, 16>}, {pipeline_mode = #tpu.pipeline_mode<synchronous>, transform_indices = @transform_4, window_bounds = array<i64: 64, 1>}, {pipeline_mode = #tpu.pipeline_mode<synchronous>, transform_indices = @transform_5, window_bounds = array<i64: 16, 64>}, {pipeline_mode = #tpu.pipeline_mode<synchronous>, transform_indices = @transform_6, window_bounds = array<i64: 16, 1>}, {pipeline_mode = #tpu.pipeline_mode<synchronous>, transform_indices = @transform_7, window_bounds = array<i64: 8, 16>}, {pipeline_mode = #tpu.pipeline_mode<synchronous>, transform_indices = @transform_8, window_bounds = array<i64: 8, 1>}, {transform_indices = @transform_9, window_bounds = array<i64: 8, 128>}]} {
    %c0 = arith.constant 0 : index
    %c0_0 = arith.constant 0 : index
    %0 = vector.load %arg1[%c0, %c0_0] : memref<32x128xf32, #tpu.memory_space<vmem>>, vector<32x128xf32>
    %c0_1 = arith.constant 0 : index
    %c0_2 = arith.constant 0 : index
    %1 = vector.load %arg2[%c0_1, %c0_2] : memref<16x32xf32, #tpu.memory_space<vmem>>, vector<16x32xf32>
    %cst = arith.constant dense<0.000000e+00> : vector<16x128xf32>
    %2 = tpu.matmul %1, %0, %cst {dimension_numbers = #tpu.dot_dimension_numbers<[1], [0], [0], [1], [0, 0, 1, 1], [], []>} : vector<16x32xf32>, vector<32x128xf32>, vector<16x128xf32> -> vector<16x128xf32>
    %c0_3 = arith.constant 0 : index
    %c0_4 = arith.constant 0 : index
    %3 = vector.load %arg3[%c0_3, %c0_4] : memref<16x1xf32, #tpu.memory_space<vmem>>, vector<16x1xf32>
    %4 = vector.broadcast %3 : vector<16x1xf32> to vector<16x128xf32>
    %5 = arith.addf %2, %4 : vector<16x128xf32>
    %cst_5 = arith.constant 0.000000e+00 : f32
    %6 = vector.broadcast %cst_5 : f32 to vector<16x128xf32>
    %7 = arith.maximumf %5, %6 : vector<16x128xf32>
    %c0_6 = arith.constant 0 : index
    %c0_7 = arith.constant 0 : index
    %8 = vector.load %arg4[%c0_6, %c0_7] : memref<64x16xf32, #tpu.memory_space<vmem>>, vector<64x16xf32>
    %cst_8 = arith.constant dense<0.000000e+00> : vector<64x128xf32>
    %9 = tpu.matmul %8, %7, %cst_8 {dimension_numbers = #tpu.dot_dimension_numbers<[1], [0], [0], [1], [0, 0, 1, 1], [], []>} : vector<64x16xf32>, vector<16x128xf32>, vector<64x128xf32> -> vector<64x128xf32>
    %c0_9 = arith.constant 0 : index
    %c0_10 = arith.constant 0 : index
    %10 = vector.load %arg5[%c0_9, %c0_10] : memref<64x1xf32, #tpu.memory_space<vmem>>, vector<64x1xf32>
    %11 = vector.broadcast %10 : vector<64x1xf32> to vector<64x128xf32>
    %12 = arith.addf %9, %11 : vector<64x128xf32>
    %cst_11 = arith.constant 0.000000e+00 : f32
    %13 = vector.broadcast %cst_11 : f32 to vector<64x128xf32>
    %14 = arith.maximumf %12, %13 : vector<64x128xf32>
    %c0_12 = arith.constant 0 : index
    %c0_13 = arith.constant 0 : index
    %15 = vector.load %arg6[%c0_12, %c0_13] : memref<16x64xf32, #tpu.memory_space<vmem>>, vector<16x64xf32>
    %cst_14 = arith.constant dense<0.000000e+00> : vector<16x128xf32>
    %16 = tpu.matmul %15, %14, %cst_14 {dimension_numbers = #tpu.dot_dimension_numbers<[1], [0], [0], [1], [0, 0, 1, 1], [], []>} : vector<16x64xf32>, vector<64x128xf32>, vector<16x128xf32> -> vector<16x128xf32>
    %c0_15 = arith.constant 0 : index
    %c0_16 = arith.constant 0 : index
    %17 = vector.load %arg7[%c0_15, %c0_16] : memref<16x1xf32, #tpu.memory_space<vmem>>, vector<16x1xf32>
    %18 = vector.broadcast %17 : vector<16x1xf32> to vector<16x128xf32>
    %19 = arith.addf %16, %18 : vector<16x128xf32>
    %cst_17 = arith.constant 0.000000e+00 : f32
    %20 = vector.broadcast %cst_17 : f32 to vector<16x128xf32>
    %21 = arith.maximumf %19, %20 : vector<16x128xf32>
    %c0_18 = arith.constant 0 : index
    %c0_19 = arith.constant 0 : index
    %22 = vector.load %arg8[%c0_18, %c0_19] : memref<8x16xf32, #tpu.memory_space<vmem>>, vector<8x16xf32>
    %cst_20 = arith.constant dense<0.000000e+00> : vector<8x128xf32>
    %23 = tpu.matmul %22, %21, %cst_20 {dimension_numbers = #tpu.dot_dimension_numbers<[1], [0], [0], [1], [0, 0, 1, 1], [], []>} : vector<8x16xf32>, vector<16x128xf32>, vector<8x128xf32> -> vector<8x128xf32>
    %c0_21 = arith.constant 0 : index
    %c0_22 = arith.constant 0 : index
    %24 = vector.load %arg9[%c0_21, %c0_22] : memref<8x1xf32, #tpu.memory_space<vmem>>, vector<8x1xf32>
    %25 = vector.broadcast %24 : vector<8x1xf32> to vector<8x128xf32>
    %26 = arith.addf %23, %25 : vector<8x128xf32>
    %c0_23 = arith.constant 0 : index
    %c0_24 = arith.constant 0 : index
    %27 = vector.load %arg10[%c0_23, %c0_24] : memref<8x128xf32, #tpu.memory_space<vmem>>, vector<8x128xf32>
    tpu.vector_store %arg10[%c0_23, %c0_24], %26 {strides = array<i32>} : memref<8x128xf32, #tpu.memory_space<vmem>>, vector<8x128xf32>,
    return
  }
  func.func @transform_0(%arg0: i32) -> (i32, i32) {
    %c0_i32 = arith.constant 0 : i32
    %c0_i32_0 = arith.constant 0 : i32
    return %c0_i32, %arg0 : i32, i32
  }
  func.func @transform_1(%arg0: i32) -> (i32, i32) {
    %c0_i32 = arith.constant 0 : i32
    %c0_i32_0 = arith.constant 0 : i32
    %c0_i32_1 = arith.constant 0 : i32
    return %c0_i32, %c0_i32_0 : i32, i32
  }
  func.func @transform_2(%arg0: i32) -> (i32, i32) {
    %c0_i32 = arith.constant 0 : i32
    %c0_i32_0 = arith.constant 0 : i32
    %c0_i32_1 = arith.constant 0 : i32
    return %c0_i32, %c0_i32_0 : i32, i32
  }
  func.func @transform_3(%arg0: i32) -> (i32, i32) {
    %c0_i32 = arith.constant 0 : i32
    %c0_i32_0 = arith.constant 0 : i32
    %c0_i32_1 = arith.constant 0 : i32
    return %c0_i32, %c0_i32_0 : i32, i32
  }
  func.func @transform_4(%arg0: i32) -> (i32, i32) {
    %c0_i32 = arith.constant 0 : i32
    %c0_i32_0 = arith.constant 0 : i32
    %c0_i32_1 = arith.constant 0 : i32
    return %c0_i32, %c0_i32_0 : i32, i32
  }
  func.func @transform_5(%arg0: i32) -> (i32, i32) {
    %c0_i32 = arith.constant 0 : i32
    %c0_i32_0 = arith.constant 0 : i32
    %c0_i32_1 = arith.constant 0 : i32
    return %c0_i32, %c0_i32_0 : i32, i32
  }
  func.func @transform_6(%arg0: i32) -> (i32, i32) {
    %c0_i32 = arith.constant 0 : i32
    %c0_i32_0 = arith.constant 0 : i32
    %c0_i32_1 = arith.constant 0 : i32
    return %c0_i32, %c0_i32_0 : i32, i32
  }
  func.func @transform_7(%arg0: i32) -> (i32, i32) {
    %c0_i32 = arith.constant 0 : i32
    %c0_i32_0 = arith.constant 0 : i32
    %c0_i32_1 = arith.constant 0 : i32
    return %c0_i32, %c0_i32_0 : i32, i32
  }
  func.func @transform_8(%arg0: i32) -> (i32, i32) {
    %c0_i32 = arith.constant 0 : i32
    %c0_i32_0 = arith.constant 0 : i32
    %c0_i32_1 = arith.constant 0 : i32
    return %c0_i32, %c0_i32_0 : i32, i32
  }
  func.func @transform_9(%arg0: i32) -> (i32, i32) {
    %c0_i32 = arith.constant 0 : i32
    %c0_i32_0 = arith.constant 0 : i32
    return %c0_i32, %arg0 : i32, i32
  }
}

</mosaic_0001>

<llo_original>
// kernel: tpu_custom_call.1
$region0: #{tpu_custom_call.1}
  #allocation0 [shape = 'u32[]', space=smem, size = 0x4, offset = 0x4, fixed_abs, tag = 'smem constant byte address 0x4 - core index']
  #allocation1 [shape = 'u32[144,128]{1,0:T(1,128)}', space=vmem, size = 0x12000, scoped, tag = 'internal scratch']
  %s0 = inlined_call_operand.vmem [shape: f32[32,512], index: 0, kind: input, shape index: {}]
  %s1 = inlined_call_operand.vmem [shape: f32[16,32], index: 1, kind: input, shape index: {}]
  %s2 = inlined_call_operand.vmem [shape: f32[16,1], index: 2, kind: input, shape index: {}]
  %s3 = inlined_call_operand.vmem [shape: f32[64,16], index: 3, kind: input, shape index: {}]
  %s4 = inlined_call_operand.vmem [shape: f32[64,1], index: 4, kind: input, shape index: {}]
  %s5 = inlined_call_operand.vmem [shape: f32[16,64], index: 5, kind: input, shape index: {}]
  %s6 = inlined_call_operand.vmem [shape: f32[16,1], index: 6, kind: input, shape index: {}]
  %s7 = inlined_call_operand.vmem [shape: f32[8,16], index: 7, kind: input, shape index: {}]
  %s8 = inlined_call_operand.vmem [shape: f32[8,1], index: 8, kind: input, shape index: {}]
  %s9 = inlined_call_operand.hbm [shape: f32[8,512], index: 9, kind: output, shape index: {}]
  %s10 = sld [smem:[#allocation0]]
  $region107: #{tpu_custom_call.1} parent=0
    _
  %s12 = ssub.s32 1, %s10
  %s13 = scalar_select 0, %s12, %s10
  $region1: #{tpu_custom_call.1} parent=0
    #allocation2 [shape = 'u8[32768]{0}', space=vmem, size = 0x8000, scoped, tag = 'input window, operand 0']
    #allocation3 [shape = 'u8[8192]{0}', space=vmem, size = 0x2000, scoped, tag = 'output window, operand 0']
    #allocation4 [shape = 's32[2]{0}', space=sflag, size = 0x8, scoped, tag = 'scoped memory for tpu_custom_call.1']
    %14 = vsyncpa [#allocation4], 0
    %s15 = scalar_lea.sflag [#allocation4], 1
    %16 = vsyncpa %s15, 0
    loop: start=0, step=1, limit=6
    $region2: #{tpu_custom_call.1} parent=1 // loop_pre_header
      _
    $region3: #{tpu_custom_call.1} parent=1 // loop_header
      %s18 = sphi 0, %s22
      %p19 = scmp.ge.s32.totalorder %s18, 6
      %s28 = sphi 0, %s30
      %s31 = sphi 0, %s28
      %s32 = sphi 0, %s31
      %s48 = sphi 0, %s32
      %s52 = sphi 0, %s52
      %s54 = sphi 0, %s52
      %s55 = sphi 0, %s54
      %s69 = sphi 0, %s55
      %s73 = sphi 0, %s73
      %s75 = sphi 0, %s73
      %s76 = sphi 0, %s75
      %s90 = sphi 0, %s76
      %s94 = sphi 0, %s94
      %s96 = sphi 0, %s94
      %s97 = sphi 0, %s96
      %s111 = sphi 0, %s97
      %s115 = sphi 0, %s115
      %s117 = sphi 0, %s115
      %s118 = sphi 0, %s117
      %s132 = sphi 0, %s118
      %s136 = sphi 0, %s136
      %s138 = sphi 0, %s136
      %s139 = sphi 0, %s138
      %s153 = sphi 0, %s139
      %s157 = sphi 0, %s157
      %s159 = sphi 0, %s157
      %s160 = sphi 0, %s159
      %s174 = sphi 0, %s160
      %s178 = sphi 0, %s178
      %s180 = sphi 0, %s178
      %s181 = sphi 0, %s180
      %s195 = sphi 0, %s181
      %s199 = sphi 0, %s199
      %s201 = sphi 0, %s199
      %s202 = sphi 0, %s201
      %s216 = sphi 0, %s202
      %s222 = sphi 0, %s224
      %s225 = sphi 0, %s222
      %s226 = sphi 0, %s225
      %s242 = sphi 0, %s226
    $region4: #{tpu_custom_call.1} parent=1 // loop_header_branch
      %21 = sbr.rel (%p19) target = $region8
    $region5: #{tpu_custom_call.1} parent=1 // loop_body
      %s23 = ssub.s32 %s18, 1
      %s24 = ssub.s32 %s18, 2
      %s25 = sadd.s32 %s18, 1
      %s26 = ssub.s32 %s18, %s25
      %p27 = scmp.eq.s32.totalorder %s26, 0
      %s29 = sadd.s32 %s28, 1
      %s30 = scalar_select %p27, %s28, %s29
      %p33 = pneg %p27
      %p34 = scmp.eq.s32.totalorder %s18, 3
      %p35 = por %p33, %p34
      %p36 = scmp.ne.s32.totalorder %s28, %s31
      %p37 = scmp.eq.s32.totalorder %s18, 0
      %p38 = por %p36, %p37
      %p39 = scmp.ne.s32.totalorder %s28, %s31
      %p40 = scmp.eq.s32.totalorder %s23, 3
      %p41 = por %p39, %p40
      %p42 = scmp.ne.s32.totalorder %s31, %s32
      %p43 = scmp.eq.s32.totalorder %s23, 0
      %p44 = por %p42, %p43
      %p45 = scmp.ne.s32.totalorder %s31, %s32
      %p46 = scmp.eq.s32.totalorder %s24, 3
      %p47 = por %p45, %p46
      %p49 = scmp.ne.s32.totalorder %s32, %s48
      %p50 = scmp.eq.s32.totalorder %s24, 0
      %p51 = por %p49, %p50
      %s53 = sadd.s32 %s52, 1
      %p56 = scmp.eq.s32.totalorder %s18, 3
      %p57 = scmp.ne.s32.totalorder %s52, %s54
      %p58 = scmp.eq.s32.totalorder %s18, 0
      %p59 = por %p57, %p58
      %p60 = scmp.ne.s32.totalorder %s52, %s54
      %p61 = scmp.eq.s32.totalorder %s23, 3
      %p62 = por %p60, %p61
      %p63 = scmp.ne.s32.totalorder %s54, %s55
      %p64 = scmp.eq.s32.totalorder %s23, 0
      %p65 = por %p63, %p64
      %p66 = scmp.ne.s32.totalorder %s54, %s55
      %p67 = scmp.eq.s32.totalorder %s24, 3
      %p68 = por %p66, %p67
      %p70 = scmp.ne.s32.totalorder %s55, %s69
      %p71 = scmp.eq.s32.totalorder %s24, 0
      %p72 = por %p70, %p71
      %s74 = sadd.s32 %s73, 1
      %p77 = scmp.eq.s32.totalorder %s18, 3
      %p78 = scmp.ne.s32.totalorder %s73, %s75
      %p79 = scmp.eq.s32.totalorder %s18, 0
      %p80 = por %p78, %p79
      %p81 = scmp.ne.s32.totalorder %s73, %s75
      %p82 = scmp.eq.s32.totalorder %s23, 3
      %p83 = por %p81, %p82
      %p84 = scmp.ne.s32.totalorder %s75, %s76
      %p85 = scmp.eq.s32.totalorder %s23, 0
      %p86 = por %p84, %p85
      %p87 = scmp.ne.s32.totalorder %s75, %s76
      %p88 = scmp.eq.s32.totalorder %s24, 3
      %p89 = por %p87, %p88
      %p91 = scmp.ne.s32.totalorder %s76, %s90
      %p92 = scmp.eq.s32.totalorder %s24, 0
      %p93 = por %p91, %p92
      %s95 = sadd.s32 %s94, 1
      %p98 = scmp.eq.s32.totalorder %s18, 3
      %p99 = scmp.ne.s32.totalorder %s94, %s96
      %p100 = scmp.eq.s32.totalorder %s18, 0
      %p101 = por %p99, %p100
      %p102 = scmp.ne.s32.totalorder %s94, %s96
      %p103 = scmp.eq.s32.totalorder %s23, 3
      %p104 = por %p102, %p103
      %p105 = scmp.ne.s32.totalorder %s96, %s97
      %p106 = scmp.eq.s32.totalorder %s23, 0
      %p107 = por %p105, %p106
      %p108 = scmp.ne.s32.totalorder %s96, %s97
      %p109 = scmp.eq.s32.totalorder %s24, 3
      %p110 = por %p108, %p109
      %p112 = scmp.ne.s32.totalorder %s97, %s111
      %p113 = scmp.eq.s32.totalorder %s24, 0
      %p114 = por %p112, %p113
      %s116 = sadd.s32 %s115, 1
      %p119 = scmp.eq.s32.totalorder %s18, 3
      %p120 = scmp.ne.s32.totalorder %s115, %s117
      %p121 = scmp.eq.s32.totalorder %s18, 0
      %p122 = por %p120, %p121
      %p123 = scmp.ne.s32.totalorder %s115, %s117
      %p124 = scmp.eq.s32.totalorder %s23, 3
      %p125 = por %p123, %p124
      %p126 = scmp.ne.s32.totalorder %s117, %s118
      %p127 = scmp.eq.s32.totalorder %s23, 0
      %p128 = por %p126, %p127
      %p129 = scmp.ne.s32.totalorder %s117, %s118
      %p130 = scmp.eq.s32.totalorder %s24, 3
      %p131 = por %p129, %p130
      %p133 = scmp.ne.s32.totalorder %s118, %s132
      %p134 = scmp.eq.s32.totalorder %s24, 0
      %p135 = por %p133, %p134
      %s137 = sadd.s32 %s136, 1
      %p140 = scmp.eq.s32.totalorder %s18, 3
      %p141 = scmp.ne.s32.totalorder %s136, %s138
      %p142 = scmp.eq.s32.totalorder %s18, 0
      %p143 = por %p141, %p142
      %p144 = scmp.ne.s32.totalorder %s136, %s138
      %p145 = scmp.eq.s32.totalorder %s23, 3
      %p146 = por %p144, %p145
      %p147 = scmp.ne.s32.totalorder %s138, %s139
      %p148 = scmp.eq.s32.totalorder %s23, 0
      %p149 = por %p147, %p148
      %p150 = scmp.ne.s32.totalorder %s138, %s139
      %p151 = scmp.eq.s32.totalorder %s24, 3
      %p152 = por %p150, %p151
      %p154 = scmp.ne.s32.totalorder %s139, %s153
      %p155 = scmp.eq.s32.totalorder %s24, 0
      %p156 = por %p154, %p155
      %s158 = sadd.s32 %s157, 1
      %p161 = scmp.eq.s32.totalorder %s18, 3
      %p162 = scmp.ne.s32.totalorder %s157, %s159
      %p163 = scmp.eq.s32.totalorder %s18, 0
      %p164 = por %p162, %p163
      %p165 = scmp.ne.s32.totalorder %s157, %s159
      %p166 = scmp.eq.s32.totalorder %s23, 3
      %p167 = por %p165, %p166
      %p168 = scmp.ne.s32.totalorder %s159, %s160
      %p169 = scmp.eq.s32.totalorder %s23, 0
      %p170 = por %p168, %p169
      %p171 = scmp.ne.s32.totalorder %s159, %s160
      %p172 = scmp.eq.s32.totalorder %s24, 3
      %p173 = por %p171, %p172
      %p175 = scmp.ne.s32.totalorder %s160, %s174
      %p176 = scmp.eq.s32.totalorder %s24, 0
      %p177 = por %p175, %p176
      %s179 = sadd.s32 %s178, 1
      %p182 = scmp.eq.s32.totalorder %s18, 3
      %p183 = scmp.ne.s32.totalorder %s178, %s180
      %p184 = scmp.eq.s32.totalorder %s18, 0
      %p185 = por %p183, %p184
      %p186 = scmp.ne.s32.totalorder %s178, %s180
      %p187 = scmp.eq.s32.totalorder %s23, 3
      %p188 = por %p186, %p187
      %p189 = scmp.ne.s32.totalorder %s180, %s181
      %p190 = scmp.eq.s32.totalorder %s23, 0
      %p191 = por %p189, %p190
      %p192 = scmp.ne.s32.totalorder %s180, %s181
      %p193 = scmp.eq.s32.totalorder %s24, 3
      %p194 = por %p192, %p193
      %p196 = scmp.ne.s32.totalorder %s181, %s195
      %p197 = scmp.eq.s32.totalorder %s24, 0
      %p198 = por %p196, %p197
      %s200 = sadd.s32 %s199, 1
      %p203 = scmp.eq.s32.totalorder %s18, 3
      %p204 = scmp.ne.s32.totalorder %s199, %s201
      %p205 = scmp.eq.s32.totalorder %s18, 0
      %p206 = por %p204, %p205
      %p207 = scmp.ne.s32.totalorder %s199, %s201
      %p208 = scmp.eq.s32.totalorder %s23, 3
      %p209 = por %p207, %p208
      %p210 = scmp.ne.s32.totalorder %s201, %s202
      %p211 = scmp.eq.s32.totalorder %s23, 0
      %p212 = por %p210, %p211
      %p213 = scmp.ne.s32.totalorder %s201, %s202
      %p214 = scmp.eq.s32.totalorder %s24, 3
      %p215 = por %p213, %p214
      %p217 = scmp.ne.s32.totalorder %s202, %s216
      %p218 = scmp.eq.s32.totalorder %s24, 0
      %p219 = por %p217, %p218
      %s220 = ssub.s32 %s18, %s25
      %p221 = scmp.eq.s32.totalorder %s220, 0
      %s223 = sadd.s32 %s222, 1
      %s224 = scalar_select %p221, %s222, %s223
      %p227 = pneg %p221
      %p228 = scmp.eq.s32.totalorder %s18, 3
      %p229 = por %p227, %p228
      %p230 = scmp.ne.s32.totalorder %s222, %s225
      %p231 = scmp.eq.s32.totalorder %s18, 0
      %p232 = por %p230, %p231
      %p233 = scmp.ne.s32.totalorder %s222, %s225
      %p234 = scmp.eq.s32.totalorder %s23, 3
      %p235 = por %p233, %p234
      %p236 = scmp.ne.s32.totalorder %s225, %s226
      %p237 = scmp.eq.s32.totalorder %s23, 0
      %p238 = por %p236, %p237
      %p239 = scmp.ne.s32.totalorder %s225, %s226
      %p240 = scmp.eq.s32.totalorder %s24, 3
      %p241 = por %p239, %p240
      %p243 = scmp.ne.s32.totalorder %s226, %s242
      %p244 = scmp.eq.s32.totalorder %s24, 0
      %p245 = por %p243, %p244
      %p246 = scmp.le.s32.totalorder 1, %s18
      %p247 = scmp.lt.s32.totalorder %s18, 5
      %p248 = pnand %p246, %p247
      %p249 = pneg %p248
      // Predicated region
      $region9: #{tpu_custom_call.1} parent=5 // pred_check
        _
      $region10: #{tpu_custom_call.1} parent=5 // pred_check_branch
        %251 = sbr.rel (%p248) target = $region12
      $region11: #{tpu_custom_call.1} parent=5 // pred_region
        %s252 = ssub.s32 %s18, 1
        // Predicated region
        $region13: #{tpu_custom_call.1} parent=11 // pred_check
          %p253 = pneg %p65
        $region14: #{tpu_custom_call.1} parent=11 // pred_check_branch
          %255 = sbr.rel (%p253) target = $region16
        $region15: #{tpu_custom_call.1} parent=11 // pred_region
          _
        $region16: #{tpu_custom_call.1} parent=11 // pred_fallthru
          _
        // Predicated region
        $region17: #{tpu_custom_call.1} parent=11 // pred_check
          %p256 = pneg %p86
        $region18: #{tpu_custom_call.1} parent=11 // pred_check_branch
          %258 = sbr.rel (%p256) target = $region20
        $region19: #{tpu_custom_call.1} parent=11 // pred_region
          _
        $region20: #{tpu_custom_call.1} parent=11 // pred_fallthru
          _
        // Predicated region
        $region21: #{tpu_custom_call.1} parent=11 // pred_check
          %p259 = pneg %p107
        $region22: #{tpu_custom_call.1} parent=11 // pred_check_branch
          %261 = sbr.rel (%p259) target = $region24
        $region23: #{tpu_custom_call.1} parent=11 // pred_region
          _
        $region24: #{tpu_custom_call.1} parent=11 // pred_fallthru
          _
        // Predicated region
        $region25: #{tpu_custom_call.1} parent=11 // pred_check
          %p262 = pneg %p128
        $region26: #{tpu_custom_call.1} parent=11 // pred_check_branch
          %264 = sbr.rel (%p262) target = $region28
        $region27: #{tpu_custom_call.1} parent=11 // pred_region
          _
        $region28: #{tpu_custom_call.1} parent=11 // pred_fallthru
          _
        // Predicated region
        $region29: #{tpu_custom_call.1} parent=11 // pred_check
          %p265 = pneg %p149
        $region30: #{tpu_custom_call.1} parent=11 // pred_check_branch
          %267 = sbr.rel (%p265) target = $region32
        $region31: #{tpu_custom_call.1} parent=11 // pred_region
          _
        $region32: #{tpu_custom_call.1} parent=11 // pred_fallthru
          _
        // Predicated region
        $region33: #{tpu_custom_call.1} parent=11 // pred_check
          %p268 = pneg %p170
        $region34: #{tpu_custom_call.1} parent=11 // pred_check_branch
          %270 = sbr.rel (%p268) target = $region36
        $region35: #{tpu_custom_call.1} parent=11 // pred_region
          _
        $region36: #{tpu_custom_call.1} parent=11 // pred_fallthru
          _
        // Predicated region
        $region37: #{tpu_custom_call.1} parent=11 // pred_check
          %p271 = pneg %p191
        $region38: #{tpu_custom_call.1} parent=11 // pred_check_branch
          %273 = sbr.rel (%p271) target = $region40
        $region39: #{tpu_custom_call.1} parent=11 // pred_region
          _
        $region40: #{tpu_custom_call.1} parent=11 // pred_fallthru
          _
        // Predicated region
        $region41: #{tpu_custom_call.1} parent=11 // pred_check
          %p274 = pneg %p212
        $region42: #{tpu_custom_call.1} parent=11 // pred_check_branch
          %276 = sbr.rel (%p274) target = $region44
        $region43: #{tpu_custom_call.1} parent=11 // pred_region
          _
        $region44: #{tpu_custom_call.1} parent=11 // pred_fallthru
          _
      $region12: #{tpu_custom_call.1} parent=5 // pred_fallthru
        _
      %p277 = scmp.lt.s32.totalorder %s18, 4
      // Predicated region
      $region45: #{tpu_custom_call.1} parent=5 // pred_check
        %p278 = pneg %p277
      $region46: #{tpu_custom_call.1} parent=5 // pred_check_branch
        %280 = sbr.rel (%p278) target = $region48
      $region47: #{tpu_custom_call.1} parent=5 // pred_region
        // Predicated region
        $region49: #{tpu_custom_call.1} parent=47 // pred_check
          %p281 = pneg %p38
        $region50: #{tpu_custom_call.1} parent=47 // pred_check_branch
          %283 = sbr.rel (%p281) target = $region52
        $region51: #{tpu_custom_call.1} parent=47 // pred_region
          %s284 = sand.u32 %s28, 1
          %s285 = sand.u32 %s28, 1
          %s286 = smul.addr %s285, 32
          %s287 = scalar_lea.vmem [#allocation2], %s286
          %s288 = smul.addr %s18, 8
          %s289 = scalar_lea.vmem %s0, %s288
          // Predicated region
          $region53: #{tpu_custom_call.1} parent=51 // pred_check
            _
          $region54: #{tpu_custom_call.1} parent=51 // pred_check_branch
            %291 = sbr.rel (0) target = $region56
          $region55: #{tpu_custom_call.1} parent=51 // pred_region
            // Predicated region
            $region57: #{tpu_custom_call.1} parent=55 // pred_check
              _
            $region58: #{tpu_custom_call.1} parent=55 // pred_check_branch
              %293 = sbr.rel (0) target = $region60
            $region59: #{tpu_custom_call.1} parent=55 // pred_region
              // Predicated region
              $region72: #{tpu_custom_call.1} parent=59 // pred_check
                _
              $region73: #{tpu_custom_call.1} parent=59 // pred_check_branch
                %314 = sbr.rel (0) target = $region75
              $region74: #{tpu_custom_call.1} parent=59 // pred_region
                loop: start=0, step=1, limit=1
                $region76: #{tpu_custom_call.1} parent=74 // loop_pre_header
                  _
                $region77: #{tpu_custom_call.1} parent=74 // loop_header
                  %s316 = sphi 0, %s320
                  %p317 = scmp.ge.s32.totalorder %s316, 1
                  %s321 = sphi %s289, %s289
                  %s322 = sphi %s287, %s287
                $region78: #{tpu_custom_call.1} parent=74 // loop_header_branch
                  %319 = sbr.rel (%p317) target = $region82
                $region79: #{tpu_custom_call.1} parent=74 // loop_body
                  %v323 = vld [vmem:[%s321] sm:$0xff]
                  %324 = vst [vmem:[%s322] sm:$0xff] %v323
                  %v325 = vld [vmem:[%s321 + $0x20] sm:$0xff]
                  %326 = vst [vmem:[%s322 + $0x8] sm:$0xff] %v325
                  %v327 = vld [vmem:[%s321 + $0x40] sm:$0xff]
                  %328 = vst [vmem:[%s322 + $0x10] sm:$0xff] %v327
                  %v329 = vld [vmem:[%s321 + $0x60] sm:$0xff]
                  %330 = vst [vmem:[%s322 + $0x18] sm:$0xff] %v329
                $region80: #{tpu_custom_call.1} parent=74 // loop_footer
                  %s320 = sadd.s32 1, %s316
                $region81: #{tpu_custom_call.1} parent=74 // loop_footer_branch
                  %315 = sbr.rel target = $region77
                $region82: #{tpu_custom_call.1} parent=74 // loop_exit
                  _
              $region75: #{tpu_custom_call.1} parent=59 // pred_fallthru
                _
              // Predicated region
              $region83: #{tpu_custom_call.1} parent=59 // pred_check
                _
              $region84: #{tpu_custom_call.1} parent=59 // pred_check_branch
                %332 = sbr.rel target = $region86
              $region85: #{tpu_custom_call.1} parent=59 // pred_region
                _
              $region86: #{tpu_custom_call.1} parent=59 // pred_fallthru
                _
            $region60: #{tpu_custom_call.1} parent=55 // pred_fallthru
              _
            // Predicated region
            $region61: #{tpu_custom_call.1} parent=55 // pred_check
              _
            $region62: #{tpu_custom_call.1} parent=55 // pred_check_branch
              %295 = sbr.rel target = $region64
            $region63: #{tpu_custom_call.1} parent=55 // pred_region
              loop: start=0, step=1, limit=1
              $region65: #{tpu_custom_call.1} parent=63 // loop_pre_header
                _
              $region66: #{tpu_custom_call.1} parent=63 // loop_header
                %s298 = sphi 0, %s302
                %p299 = scmp.ge.s32.totalorder %s298, 1
                %s303 = sphi %s289, %s289
                %s304 = sphi %s287, %s287
              $region67: #{tpu_custom_call.1} parent=63 // loop_header_branch
                %301 = sbr.rel (%p299) target = $region71
              $region68: #{tpu_custom_call.1} parent=63 // loop_body
                %v305 = vld [vmem:[%s303] sm:$0xff]
                %306 = vst [vmem:[%s304] sm:$0xff] %v305
                %v307 = vld [vmem:[%s303 + $0x20] sm:$0xff]
                %308 = vst [vmem:[%s304 + $0x8] sm:$0xff] %v307
                %v309 = vld [vmem:[%s303 + $0x40] sm:$0xff]
                %310 = vst [vmem:[%s304 + $0x10] sm:$0xff] %v309
                %v311 = vld [vmem:[%s303 + $0x60] sm:$0xff]
                %312 = vst [vmem:[%s304 + $0x18] sm:$0xff] %v311
              $region69: #{tpu_custom_call.1} parent=63 // loop_footer
                %s302 = sadd.s32 1, %s298
              $region70: #{tpu_custom_call.1} parent=63 // loop_footer_branch
                %297 = sbr.rel target = $region66
              $region71: #{tpu_custom_call.1} parent=63 // loop_exit
                _
            $region64: #{tpu_custom_call.1} parent=55 // pred_fallthru
              _
          $region56: #{tpu_custom_call.1} parent=51 // pred_fallthru
            _
          %333 = vnop
        $region52: #{tpu_custom_call.1} parent=47 // pred_fallthru
          _
      $region48: #{tpu_custom_call.1} parent=5 // pred_fallthru
        _
      %p334 = scmp.le.s32.totalorder 1, %s18
      %p335 = scmp.lt.s32.totalorder %s18, 5
      %p336 = pnand %p334, %p335
      %p337 = pneg %p336
      // Predicated region
      $region87: #{tpu_custom_call.1} parent=5 // pred_check
        _
      $region88: #{tpu_custom_call.1} parent=5 // pred_check_branch
        %339 = sbr.rel (%p336) target = $region90
      $region89: #{tpu_custom_call.1} parent=5 // pred_region
        %s340 = ssub.s32 %s18, 1
        %s341 = sand.u32 %s31, 1
        %s342 = sand.u32 %s31, 1
        %s343 = smul.addr %s342, 32
        %s344 = scalar_lea.vmem [#allocation2], %s343
        // Predicated region
        $region91: #{tpu_custom_call.1} parent=89 // pred_check
          %p345 = pneg %p44
        $region92: #{tpu_custom_call.1} parent=89 // pred_check_branch
          %347 = sbr.rel (%p345) target = $region94
        $region93: #{tpu_custom_call.1} parent=89 // pred_region
          _
        $region94: #{tpu_custom_call.1} parent=89 // pred_fallthru
          _
        %s348 = sand.u32 %s31, 1
        %s349 = sand.u32 %s31, 1
        %s350 = smul.addr %s349, 32
        %s351 = scalar_lea.vmem [#allocation2], %s350
        %p352 = pneg %p44
        %p353 = pneg %p41
        %p354 = pneg %p65
        %p355 = pneg %p62
        %p356 = pneg %p86
        %p357 = pneg %p83
        %p358 = pneg %p107
        %p359 = pneg %p104
        %p360 = pneg %p128
        %p361 = pneg %p125
        %p362 = pneg %p149
        %p363 = pneg %p146
        %p364 = pneg %p170
        %p365 = pneg %p167
        %p366 = pneg %p191
        %p367 = pneg %p188
        %p368 = pneg %p212
        %p369 = pneg %p209
        %p370 = pneg %p238
        %p371 = pneg %p235
        %s372 = sand.u32 %s225, 1
        %s373 = scalar_lea.sflag [#allocation4], %s372
        %s374 = sand.u32 %s225, 1
        %s375 = smul.addr %s374, 8
        %s376 = scalar_lea.vmem [#allocation3], %s375
        %v377 = vld [vmem:[%s344] sm:$0xff]
        %v378 = vld [vmem:[%s344 + $0x8] sm:$0xff]
        %v379 = vld [vmem:[%s344 + $0x10] sm:$0xff]
        %v380 = vld [vmem:[%s344 + $0x18] sm:$0xff]
        %v381 = vld [vmem:[%s1] sm:$0xff]
        %v382 = vld [vmem:[%s1 + $0x8] sm:$0xff]
        %v383 = vld [vmem:[%s2] sm:$0xff]
        %v384 = vld [vmem:[%s2 + $0x8] sm:$0xff]
        %386 = vset.pattern.permute.xlu0 0
        %387 = vperm.xlu0 %386, %v383
        %v388 = vpop.permute.xlu0 %387
        %391 = vset.pattern.permute.xlu0 0
        %392 = vperm.xlu0 %391, %v384
        %v393 = vpop.permute.xlu0 %392
        %vm395 = vcmask 261120
        %v397 = vsel %vm395, %v381, 0
        %v400 = vsel %vm395, %v382, 0
        %402 = vmatprep.subr.mxu0 0.0
        %403 = vmatpush1.msra.mxu0 %v377
        %404 = vmatprep.subr.mxu0 0.0
        %405 = vmatpush1.msra.mxu0 %v378
        %406 = vmatprep.subr.mxu0 0.0
        %407 = vmatpush1.msra.mxu0 %v379
        %408 = vmatprep.subr.mxu0 0.0
        %409 = vmatpush1.msra.mxu0 %v380
        %410 = vmatprep.subr.mxu0 0.0
        %411 = vmatpush1.msra.mxu0 0.0
        %412 = vmatprep.subr.mxu0 0.0
        %413 = vmatpush1.msra.mxu0 0.0
        %414 = vmatprep.subr.mxu0 0.0
        %415 = vmatpush1.msra.mxu0 0.0
        %416 = vmatprep.subr.mxu0 0.0
        %417 = vmatpush1.msra.mxu0 0.0
        %418 = vmatprep.subr.mxu0 0.0
        %419 = vmatpush1.msra.mxu0 0.0
        %420 = vmatprep.subr.mxu0 0.0
        %421 = vmatpush1.msra.mxu0 0.0
        %422 = vmatprep.subr.mxu0 0.0
        %423 = vmatpush1.msra.mxu0 0.0
        %424 = vmatprep.subr.mxu0 0.0
        %425 = vmatpush1.msra.mxu0 0.0
        %426 = vmatprep.subr.mxu0 0.0
        %427 = vmatpush1.msra.mxu0 0.0
        %428 = vmatprep.subr.mxu0 0.0
        %429 = vmatpush1.msra.mxu0 0.0
        %430 = vmatprep.subr.mxu0 0.0
        %431 = vmatpush1.msra.mxu0 0.0
        %432 = vmatprep.subr.mxu0 0.0
        %433 = vmatpush1.msra.mxu0 0.0
        %434 = vmatprep.subr.mxu0 0.0
        %435 = vmatpush1.msra.mxu0 0.0
        %436 = vmatprep.subr.mxu0 0.0
        %437 = vmatpush1.msra.mxu0 0.0
        %438 = vmatprep.subr.mxu0 0.0
        %439 = vmatpush1.msra.mxu0 0.0
        %440 = vmatprep.subr.mxu0 0.0
        %441 = vmatpush1.msra.mxu0 0.0
        %442 = vmatprep.subr.mxu0 0.0
        %443 = vmatpush1.msra.mxu0 0.0
        %444 = vmatprep.subr.mxu0 0.0
        %445 = vmatpush1.msra.mxu0 0.0
        %446 = vmatprep.subr.mxu0 0.0
        %447 = vmatpush1.msra.mxu0 0.0
        %448 = vmatprep.subr.mxu0 0.0
        %449 = vmatpush1.msra.mxu0 0.0
        %450 = vmatprep.subr.mxu0 0.0
        %451 = vmatpush1.msra.mxu0 0.0
        %452 = vmatprep.subr.mxu0 0.0
        %453 = vmatpush1.msra.mxu0 0.0
        %454 = vmatprep.subr.mxu0 0.0
        %455 = vmatpush1.msra.mxu0 0.0
        %456 = vmatprep.subr.mxu0 0.0
        %457 = vmatpush1.msra.mxu0 0.0
        %458 = vmatprep.subr.mxu0 0.0
        %459 = vmatpush1.msra.mxu0 0.0
        %460 = vmatprep.subr.mxu0 0.0
        %461 = vmatpush1.msra.mxu0 0.0
        %462 = vmatprep.subr.mxu0 0.0
        %463 = vmatpush1.msra.mxu0 0.0
        %464 = vmatprep.subr.mxu0 0.0
        %465 = vmatpush1.msra.mxu0 0.0
        %466 = vmatprep.mubr.f32.mxu0 0.0
        %467 = vmatmul.mubr.f32.gmra.mrb[0].mxu0 %v397
        %v468 = vpop.f32.mrb[0].mxu0
        %v469 = vadd.f32 %v388, %v468
        %v470 = vpop.f32.mrb[0].mxu0
        %471 = vmatprep.mubr.f32.mxu0 0.0
        %472 = vmatmul.mubr.f32.gmra.mrb[0].mxu0 %v400
        %v473 = vpop.f32.mrb[0].mxu0
        %v474 = vadd.f32 %v393, %v473
        %v475 = vpop.f32.mrb[0].mxu0
        %476 = vdwg.mxu0
        %v477 = vmax.f32 %v469, 0.0
        %v478 = vmax.f32 %v474, 0.0
        %v479 = vld [vmem:[%s3] sm:$0xff]
        %v480 = vld [vmem:[%s3 + $0x8] sm:$0xff]
        %v481 = vld [vmem:[%s3 + $0x10] sm:$0xff]
        %v482 = vld [vmem:[%s3 + $0x18] sm:$0xff]
        %v483 = vld [vmem:[%s3 + $0x20] sm:$0xff]
        %v484 = vld [vmem:[%s3 + $0x28] sm:$0xff]
        %v485 = vld [vmem:[%s3 + $0x30] sm:$0xff]
        %v486 = vld [vmem:[%s3 + $0x38] sm:$0xff]
        %v487 = vld [vmem:[%s4] sm:$0xff]
        %v488 = vld [vmem:[%s4 + $0x8] sm:$0xff]
        %v489 = vld [vmem:[%s4 + $0x10] sm:$0xff]
        %v490 = vld [vmem:[%s4 + $0x18] sm:$0xff]
        %v491 = vld [vmem:[%s4 + $0x20] sm:$0xff]
        %v492 = vld [vmem:[%s4 + $0x28] sm:$0xff]
        %v493 = vld [vmem:[%s4 + $0x30] sm:$0xff]
        %v494 = vld [vmem:[%s4 + $0x38] sm:$0xff]
        %496 = vset.pattern.permute.xlu0 0
        %497 = vperm.xlu0 %496, %v487
        %v498 = vpop.permute.xlu0 %497
        %501 = vset.pattern.permute.xlu0 0
        %502 = vperm.xlu0 %501, %v488
        %v503 = vpop.permute.xlu0 %502
        %506 = vset.pattern.permute.xlu0 0
        %507 = vperm.xlu0 %506, %v489
        %v508 = vpop.permute.xlu0 %507
        %511 = vset.pattern.permute.xlu0 0
        %512 = vperm.xlu0 %511, %v490
        %v513 = vpop.permute.xlu0 %512
        %516 = vset.pattern.permute.xlu0 0
        %517 = vperm.xlu0 %516, %v491
        %v518 = vpop.permute.xlu0 %517
        %521 = vset.pattern.permute.xlu0 0
        %522 = vperm.xlu0 %521, %v492
        %v523 = vpop.permute.xlu0 %522
        %526 = vset.pattern.permute.xlu0 0
        %527 = vperm.xlu0 %526, %v493
        %v528 = vpop.permute.xlu0 %527
        %531 = vset.pattern.permute.xlu0 0
        %532 = vperm.xlu0 %531, %v494
        %v533 = vpop.permute.xlu0 %532
        %vm535 = vcmask 130048
        %v537 = vsel %vm535, %v479, 0
        %v540 = vsel %vm535, %v480, 0
        %v543 = vsel %vm535, %v481, 0
        %v546 = vsel %vm535, %v482, 0
        %v549 = vsel %vm535, %v483, 0
        %v552 = vsel %vm535, %v484, 0
        %v555 = vsel %vm535, %v485, 0
        %v558 = vsel %vm535, %v486, 0
        %560 = vmatprep.subr.mxu0 0.0
        %561 = vmatpush1.msra.mxu0 %v477
        %562 = vmatprep.subr.mxu0 0.0
        %563 = vmatpush1.msra.mxu0 %v478
        %564 = vmatprep.subr.mxu0 0.0
        %565 = vmatpush1.msra.mxu0 0.0
        %566 = vmatprep.subr.mxu0 0.0
        %567 = vmatpush1.msra.mxu0 0.0
        %568 = vmatprep.subr.mxu0 0.0
        %569 = vmatpush1.msra.mxu0 0.0
        %570 = vmatprep.subr.mxu0 0.0
        %571 = vmatpush1.msra.mxu0 0.0
        %572 = vmatprep.subr.mxu0 0.0
        %573 = vmatpush1.msra.mxu0 0.0
        %574 = vmatprep.subr.mxu0 0.0
        %575 = vmatpush1.msra.mxu0 0.0
        %576 = vmatprep.subr.mxu0 0.0
        %577 = vmatpush1.msra.mxu0 0.0
        %578 = vmatprep.subr.mxu0 0.0
        %579 = vmatpush1.msra.mxu0 0.0
        %580 = vmatprep.subr.mxu0 0.0
        %581 = vmatpush1.msra.mxu0 0.0
        %582 = vmatprep.subr.mxu0 0.0
        %583 = vmatpush1.msra.mxu0 0.0
        %584 = vmatprep.subr.mxu0 0.0
        %585 = vmatpush1.msra.mxu0 0.0
        %586 = vmatprep.subr.mxu0 0.0
        %587 = vmatpush1.msra.mxu0 0.0
        %588 = vmatprep.subr.mxu0 0.0
        %589 = vmatpush1.msra.mxu0 0.0
        %590 = vmatprep.subr.mxu0 0.0
        %591 = vmatpush1.msra.mxu0 0.0
        %592 = vmatprep.subr.mxu0 0.0
        %593 = vmatpush1.msra.mxu0 0.0
        %594 = vmatprep.subr.mxu0 0.0
        %595 = vmatpush1.msra.mxu0 0.0
        %596 = vmatprep.subr.mxu0 0.0
        %597 = vmatpush1.msra.mxu0 0.0
        %598 = vmatprep.subr.mxu0 0.0
        %599 = vmatpush1.msra.mxu0 0.0
        %600 = vmatprep.subr.mxu0 0.0
        %601 = vmatpush1.msra.mxu0 0.0
        %602 = vmatprep.subr.mxu0 0.0
        %603 = vmatpush1.msra.mxu0 0.0
        %604 = vmatprep.subr.mxu0 0.0
        %605 = vmatpush1.msra.mxu0 0.0
        %606 = vmatprep.subr.mxu0 0.0
        %607 = vmatpush1.msra.mxu0 0.0
        %608 = vmatprep.subr.mxu0 0.0
        %609 = vmatpush1.msra.mxu0 0.0
        %610 = vmatprep.subr.mxu0 0.0
        %611 = vmatpush1.msra.mxu0 0.0
        %612 = vmatprep.subr.mxu0 0.0
        %613 = vmatpush1.msra.mxu0 0.0
        %614 = vmatprep.subr.mxu0 0.0
        %615 = vmatpush1.msra.mxu0 0.0
        %616 = vmatprep.subr.mxu0 0.0
        %617 = vmatpush1.msra.mxu0 0.0
        %618 = vmatprep.subr.mxu0 0.0
        %619 = vmatpush1.msra.mxu0 0.0
        %620 = vmatprep.subr.mxu0 0.0
        %621 = vmatpush1.msra.mxu0 0.0
        %622 = vmatprep.subr.mxu0 0.0
        %623 = vmatpush1.msra.mxu0 0.0
        %624 = vmatprep.mubr.f32.mxu0 0.0
        %625 = vmatmul.mubr.f32.gmra.mrb[0].mxu0 %v537
        %v626 = vpop.f32.mrb[0].mxu0
        %v627 = vadd.f32 %v498, %v626
        %v628 = vpop.f32.mrb[0].mxu0
        %629 = vmatprep.mubr.f32.mxu0 0.0
        %630 = vmatmul.mubr.f32.gmra.mrb[0].mxu0 %v540
        %v631 = vpop.f32.mrb[0].mxu0
        %v632 = vadd.f32 %v503, %v631
        %v633 = vpop.f32.mrb[0].mxu0
        %634 = vmatprep.mubr.f32.mxu0 0.0
        %635 = vmatmul.mubr.f32.gmra.mrb[0].mxu0 %v543
        %v636 = vpop.f32.mrb[0].mxu0
        %v637 = vadd.f32 %v508, %v636
        %v638 = vpop.f32.mrb[0].mxu0
        %639 = vmatprep.mubr.f32.mxu0 0.0
        %640 = vmatmul.mubr.f32.gmra.mrb[0].mxu0 %v546
        %v641 = vpop.f32.mrb[0].mxu0
        %v642 = vadd.f32 %v513, %v641
        %v643 = vpop.f32.mrb[0].mxu0
        %644 = vmatprep.mubr.f32.mxu0 0.0
        %645 = vmatmul.mubr.f32.gmra.mrb[0].mxu0 %v549
        %v646 = vpop.f32.mrb[0].mxu0
        %v647 = vadd.f32 %v518, %v646
        %v648 = vpop.f32.mrb[0].mxu0
        %649 = vmatprep.mubr.f32.mxu0 0.0
        %650 = vmatmul.mubr.f32.gmra.mrb[0].mxu0 %v552
        %v651 = vpop.f32.mrb[0].mxu0
        %v652 = vadd.f32 %v523, %v651
        %v653 = vpop.f32.mrb[0].mxu0
        %654 = vmatprep.mubr.f32.mxu0 0.0
        %655 = vmatmul.mubr.f32.gmra.mrb[0].mxu0 %v555
        %v656 = vpop.f32.mrb[0].mxu0
        %v657 = vadd.f32 %v528, %v656
        %v658 = vpop.f32.mrb[0].mxu0
        %659 = vmatprep.mubr.f32.mxu0 0.0
        %660 = vmatmul.mubr.f32.gmra.mrb[0].mxu0 %v558
        %v661 = vpop.f32.mrb[0].mxu0
        %v662 = vadd.f32 %v533, %v661
        %v663 = vpop.f32.mrb[0].mxu0
        %664 = vdwg.mxu0
        %v665 = vmax.f32 %v627, 0.0
        %v666 = vmax.f32 %v632, 0.0
        %v667 = vmax.f32 %v637, 0.0
        %v668 = vmax.f32 %v642, 0.0
        %v669 = vmax.f32 %v647, 0.0
        %v670 = vmax.f32 %v652, 0.0
        %v671 = vmax.f32 %v657, 0.0
        %v672 = vmax.f32 %v662, 0.0
        %v673 = vld [vmem:[%s5] sm:$0xff]
        %v674 = vld [vmem:[%s5 + $0x8] sm:$0xff]
        %v675 = vld [vmem:[%s6] sm:$0xff]
        %v676 = vld [vmem:[%s6 + $0x8] sm:$0xff]
        %678 = vset.pattern.permute.xlu0 0
        %679 = vperm.xlu0 %678, %v675
        %v680 = vpop.permute.xlu0 %679
        %683 = vset.pattern.permute.xlu0 0
        %684 = vperm.xlu0 %683, %v676
        %v685 = vpop.permute.xlu0 %684
        %vm687 = vcmask 523264
        %v689 = vsel %vm687, %v673, 0
        %v692 = vsel %vm687, %v674, 0
        %694 = vmatprep.subr.mxu0 0.0
        %695 = vmatpush1.msra.mxu0 %v665
        %696 = vmatprep.subr.mxu0 0.0
        %697 = vmatpush1.msra.mxu0 %v666
        %698 = vmatprep.subr.mxu0 0.0
        %699 = vmatpush1.msra.mxu0 %v667
        %700 = vmatprep.subr.mxu0 0.0
        %701 = vmatpush1.msra.mxu0 %v668
        %702 = vmatprep.subr.mxu0 0.0
        %703 = vmatpush1.msra.mxu0 %v669
        %704 = vmatprep.subr.mxu0 0.0
        %705 = vmatpush1.msra.mxu0 %v670
        %706 = vmatprep.subr.mxu0 0.0
        %707 = vmatpush1.msra.mxu0 %v671
        %708 = vmatprep.subr.mxu0 0.0
        %709 = vmatpush1.msra.mxu0 %v672
        %710 = vmatprep.subr.mxu0 0.0
        %711 = vmatpush1.msra.mxu0 0.0
        %712 = vmatprep.subr.mxu0 0.0
        %713 = vmatpush1.msra.mxu0 0.0
        %714 = vmatprep.subr.mxu0 0.0
        %715 = vmatpush1.msra.mxu0 0.0
        %716 = vmatprep.subr.mxu0 0.0
        %717 = vmatpush1.msra.mxu0 0.0
        %718 = vmatprep.subr.mxu0 0.0
        %719 = vmatpush1.msra.mxu0 0.0
        %720 = vmatprep.subr.mxu0 0.0
        %721 = vmatpush1.msra.mxu0 0.0
        %722 = vmatprep.subr.mxu0 0.0
        %723 = vmatpush1.msra.mxu0 0.0
        %724 = vmatprep.subr.mxu0 0.0
        %725 = vmatpush1.msra.mxu0 0.0
        %726 = vmatprep.subr.mxu0 0.0
        %727 = vmatpush1.msra.mxu0 0.0
        %728 = vmatprep.subr.mxu0 0.0
        %729 = vmatpush1.msra.mxu0 0.0
        %730 = vmatprep.subr.mxu0 0.0
        %731 = vmatpush1.msra.mxu0 0.0
        %732 = vmatprep.subr.mxu0 0.0
        %733 = vmatpush1.msra.mxu0 0.0
        %734 = vmatprep.subr.mxu0 0.0
        %735 = vmatpush1.msra.mxu0 0.0
        %736 = vmatprep.subr.mxu0 0.0
        %737 = vmatpush1.msra.mxu0 0.0
        %738 = vmatprep.subr.mxu0 0.0
        %739 = vmatpush1.msra.mxu0 0.0
        %740 = vmatprep.subr.mxu0 0.0
        %741 = vmatpush1.msra.mxu0 0.0
        %742 = vmatprep.subr.mxu0 0.0
        %743 = vmatpush1.msra.mxu0 0.0
        %744 = vmatprep.subr.mxu0 0.0
        %745 = vmatpush1.msra.mxu0 0.0
        %746 = vmatprep.subr.mxu0 0.0
        %747 = vmatpush1.msra.mxu0 0.0
        %748 = vmatprep.subr.mxu0 0.0
        %749 = vmatpush1.msra.mxu0 0.0
        %750 = vmatprep.subr.mxu0 0.0
        %751 = vmatpush1.msra.mxu0 0.0
        %752 = vmatprep.subr.mxu0 0.0
        %753 = vmatpush1.msra.mxu0 0.0
        %754 = vmatprep.subr.mxu0 0.0
        %755 = vmatpush1.msra.mxu0 0.0
        %756 = vmatprep.subr.mxu0 0.0
        %757 = vmatpush1.msra.mxu0 0.0
        %758 = vmatprep.mubr.f32.mxu0 0.0
        %759 = vmatmul.mubr.f32.gmra.mrb[0].mxu0 %v689
        %v760 = vpop.f32.mrb[0].mxu0
        %v761 = vadd.f32 %v680, %v760
        %v762 = vpop.f32.mrb[0].mxu0
        %763 = vmatprep.mubr.f32.mxu0 0.0
        %764 = vmatmul.mubr.f32.gmra.mrb[0].mxu0 %v692
        %v765 = vpop.f32.mrb[0].mxu0
        %v766 = vadd.f32 %v685, %v765
        %v767 = vpop.f32.mrb[0].mxu0
        %768 = vdwg.mxu0
        %v769 = vmax.f32 %v761, 0.0
        %v770 = vmax.f32 %v766, 0.0
        %v771 = vld [vmem:[%s7] sm:$0xff]
        %v772 = vld [vmem:[%s8] sm:$0xff]
        %774 = vset.pattern.permute.xlu0 0
        %775 = vperm.xlu0 %774, %v772
        %v776 = vpop.permute.xlu0 %775
        %v779 = vsel %vm535, %v771, 0
        %781 = vmatprep.subr.mxu0 0.0
        %782 = vmatpush1.msra.mxu0 %v769
        %783 = vmatprep.subr.mxu0 0.0
        %784 = vmatpush1.msra.mxu0 %v770
        %785 = vmatprep.subr.mxu0 0.0
        %786 = vmatpush1.msra.mxu0 0.0
        %787 = vmatprep.subr.mxu0 0.0
        %788 = vmatpush1.msra.mxu0 0.0
        %789 = vmatprep.subr.mxu0 0.0
        %790 = vmatpush1.msra.mxu0 0.0
        %791 = vmatprep.subr.mxu0 0.0
        %792 = vmatpush1.msra.mxu0 0.0
        %793 = vmatprep.subr.mxu0 0.0
        %794 = vmatpush1.msra.mxu0 0.0
        %795 = vmatprep.subr.mxu0 0.0
        %796 = vmatpush1.msra.mxu0 0.0
        %797 = vmatprep.subr.mxu0 0.0
        %798 = vmatpush1.msra.mxu0 0.0
        %799 = vmatprep.subr.mxu0 0.0
        %800 = vmatpush1.msra.mxu0 0.0
        %801 = vmatprep.subr.mxu0 0.0
        %802 = vmatpush1.msra.mxu0 0.0
        %803 = vmatprep.subr.mxu0 0.0
        %804 = vmatpush1.msra.mxu0 0.0
        %805 = vmatprep.subr.mxu0 0.0
        %806 = vmatpush1.msra.mxu0 0.0
        %807 = vmatprep.subr.mxu0 0.0
        %808 = vmatpush1.msra.mxu0 0.0
        %809 = vmatprep.subr.mxu0 0.0
        %810 = vmatpush1.msra.mxu0 0.0
        %811 = vmatprep.subr.mxu0 0.0
        %812 = vmatpush1.msra.mxu0 0.0
        %813 = vmatprep.subr.mxu0 0.0
        %814 = vmatpush1.msra.mxu0 0.0
        %815 = vmatprep.subr.mxu0 0.0
        %816 = vmatpush1.msra.mxu0 0.0
        %817 = vmatprep.subr.mxu0 0.0
        %818 = vmatpush1.msra.mxu0 0.0
        %819 = vmatprep.subr.mxu0 0.0
        %820 = vmatpush1.msra.mxu0 0.0
        %821 = vmatprep.subr.mxu0 0.0
        %822 = vmatpush1.msra.mxu0 0.0
        %823 = vmatprep.subr.mxu0 0.0
        %824 = vmatpush1.msra.mxu0 0.0
        %825 = vmatprep.subr.mxu0 0.0
        %826 = vmatpush1.msra.mxu0 0.0
        %827 = vmatprep.subr.mxu0 0.0
        %828 = vmatpush1.msra.mxu0 0.0
        %829 = vmatprep.subr.mxu0 0.0
        %830 = vmatpush1.msra.mxu0 0.0
        %831 = vmatprep.subr.mxu0 0.0
        %832 = vmatpush1.msra.mxu0 0.0
        %833 = vmatprep.subr.mxu0 0.0
        %834 = vmatpush1.msra.mxu0 0.0
        %835 = vmatprep.subr.mxu0 0.0
        %836 = vmatpush1.msra.mxu0 0.0
        %837 = vmatprep.subr.mxu0 0.0
        %838 = vmatpush1.msra.mxu0 0.0
        %839 = vmatprep.subr.mxu0 0.0
        %840 = vmatpush1.msra.mxu0 0.0
        %841 = vmatprep.subr.mxu0 0.0
        %842 = vmatpush1.msra.mxu0 0.0
        %843 = vmatprep.subr.mxu0 0.0
        %844 = vmatpush1.msra.mxu0 0.0
        %845 = vmatprep.mubr.f32.mxu0 0.0
        %846 = vmatmul.mubr.f32.gmra.mrb[0].mxu0 %v779
        %v847 = vpop.f32.mrb[0].mxu0
        %v848 = vadd.f32 %v776, %v847
        %v849 = vpop.f32.mrb[0].mxu0
        %850 = vdwg.mxu0
        %851 = vst [vmem:[%s376] sm:$0xff] %v848
        %s852 = sand.u32 %s225, 1
        %s853 = scalar_lea.sflag [#allocation4], %s852
        %s854 = sand.u32 %s225, 1
        %s855 = smul.addr %s854, 8
        %s856 = scalar_lea.vmem [#allocation3], %s855
        // Predicated region
        $region95: #{tpu_custom_call.1} parent=89 // pred_check
          %p857 = pneg %p235
        $region96: #{tpu_custom_call.1} parent=89 // pred_check_branch
          %859 = sbr.rel (%p857) target = $region98
        $region97: #{tpu_custom_call.1} parent=89 // pred_region
          %s861 = ssub.s32 128, 128
          %862 = vsyncadd %s853, %s861
          %s863 = smul.addr %s23, 128
          %s864 = scalar_lea.hbm %s9, %s863
          %s866 = sshll.u32 %s856, 4
          %s867 = int_to_ptr.vmem [resolvable:$true] %s866
          %869 = dma.vmem_to_hbm [thread:$0]  %s867, 128, %s864, %s853
        $region98: #{tpu_custom_call.1} parent=89 // pred_fallthru
          _
      $region90: #{tpu_custom_call.1} parent=5 // pred_fallthru
        _
      %p870 = scmp.le.s32.totalorder 2, %s18
      // Predicated region
      $region99: #{tpu_custom_call.1} parent=5 // pred_check
        %p871 = pneg %p870
      $region100: #{tpu_custom_call.1} parent=5 // pred_check_branch
        %873 = sbr.rel (%p871) target = $region102
      $region101: #{tpu_custom_call.1} parent=5 // pred_region
        %s874 = ssub.s32 %s18, 2
        // Predicated region
        $region103: #{tpu_custom_call.1} parent=101 // pred_check
          %p875 = pneg %p241
        $region104: #{tpu_custom_call.1} parent=101 // pred_check_branch
          %877 = sbr.rel (%p875) target = $region106
        $region105: #{tpu_custom_call.1} parent=101 // pred_region
          %s878 = sand.u32 %s226, 1
          %s879 = scalar_lea.sflag [#allocation4], %s878
          %s880 = sand.u32 %s226, 1
          %s881 = smul.addr %s880, 8
          %s882 = scalar_lea.vmem [#allocation3], %s881
          %883 = dma.done %s879, 128
        $region106: #{tpu_custom_call.1} parent=101 // pred_fallthru
          _
      $region102: #{tpu_custom_call.1} parent=5 // pred_fallthru
        _
    $region6: #{tpu_custom_call.1} parent=1 // loop_footer
      %s22 = sadd.s32 1, %s18
    $region7: #{tpu_custom_call.1} parent=1 // loop_footer_branch
      %17 = sbr.rel target = $region3
    $region8: #{tpu_custom_call.1} parent=1 // loop_exit
      _
    %884 = vsyncpa [#allocation4], 1
    %s885 = scalar_lea.sflag [#allocation4], 1
    %886 = vsyncpa %s885, 1

</llo_original>
